<compile_context>
chip_gen: v5e
topology: v5e:2x2
jax: 0.10.0
libtpu: 0.0.40
codegen_flags: <defaults>
</compile_context>

<pallas_src>
import functools

import jax
import jax.numpy as jnp
from jax.experimental import pallas as pl
from jax.experimental.pallas import tpu as pltpu


# ---------------------------------------------------------------------------
# Tiling / VMEM policy
# ---------------------------------------------------------------------------
_VMEM_LIMIT_BYTES = 64 * 1024 * 1024   # headroom over the 16/32 MiB scoped defaults
_CONV1_TILE_CAP = 16384                # 4K=36 rows bf16  -> ~8  MiB / block set
_CONV2_TILE_CAP = 8192                 # 4K=192 rows bf16 -> ~12 MiB / block set
_FC_TILE_CAP = 2048                    # K=864 rows bf16  -> ~7  MiB / block set


def _round_up(x, m):
    return (x + m - 1) // m * m


def _pick_tile(m, cap):
    """Largest lane tile (multiple of 128) under `cap`, keeping >=2 grid steps
    once m is big enough so the parallel axis can feed 2 TensorCores (v7x)."""
    half = _round_up(max((m + 1) // 2, 128), 128)
    return min(cap, half)


# ---------------------------------------------------------------------------
# Pallas kernels
# ---------------------------------------------------------------------------
def _conv_pool_kernel(cout, cpad, p_ref, w_ref, b_ref, o_ref):
    """Fused conv (im2col matmul) + 2x2 max-pool + bias, lane-dense output.

    p_ref: (4*K, TILE_M)      bf16 -- the 4 pool-window taps stacked on sublanes
    w_ref: (4*cpad, 4*K)      bf16 -- block-diagonal over taps (Cout padded to cpad)
    b_ref: (cout, 1)          f32
    o_ref: (cout, TILE_M)     bf16
    """
    # One MXU push for all 4 taps: result row t*cpad + c is tap t, channel c.
    acc = jnp.dot(w_ref[...], p_ref[...], preferred_element_type=jnp.float32)
    m = acc[0:cpad]
    for t in range(1, 4):                       # tap max on the VPU (8-aligned groups)
        m = jnp.maximum(m, acc[t * cpad:(t + 1) * cpad])
    # bias once after the max (max(x) + b == max(x + b)); cast to bf16 at store.
    o_ref[...] = (m[:cout] + b_ref[...]).astype(o_ref.dtype)


def _linear_kernel(x_ref, w_ref, b_ref, o_ref):
    """o = W @ x + b, lane-dense over the batch axis.

    x_ref: (K, TILE_N) bf16   w_ref: (C, K) bf16   b_ref: (C, 1) f32
    o_ref: (C, TILE_N) f32
    """
    o_ref[...] = (
        jnp.dot(w_ref[...], x_ref[...], preferred_element_type=jnp.float32)
        + b_ref[...]
    ).astype(o_ref.dtype)


# ---------------------------------------------------------------------------
# pallas_call wrappers (1-D grid over the lane axis M)
# ---------------------------------------------------------------------------
def conv_pool(patches, w_bd, bias_col, cout, tile_m):
    k4, m_pad = patches.shape
    c4 = w_bd.shape[0]
    cpad = c4 // 4
    return pl.pallas_call(
        functools.partial(_conv_pool_kernel, cout, cpad),
        out_shape=jax.ShapeDtypeStruct((cout, m_pad), jnp.bfloat16),
        grid=(m_pad // tile_m,),
        in_specs=[
            pl.BlockSpec((k4, tile_m), lambda i: (0, i)),
            pl.BlockSpec((c4, k4), lambda i: (0, 0)),
            pl.BlockSpec((cout, 1), lambda i: (0, 0)),
        ],
        out_specs=pl.BlockSpec((cout, tile_m), lambda i: (0, i)),
        compiler_params=pltpu.CompilerParams(
            dimension_semantics=("parallel",),
            vmem_limit_bytes=_VMEM_LIMIT_BYTES),
    )(patches, w_bd, bias_col)


def linear(x_t, w, bias_col, tile_n):
    k, n_pad = x_t.shape
    c = w.shape[0]
    return pl.pallas_call(
        _linear_kernel,
        out_shape=jax.ShapeDtypeStruct((c, n_pad), jnp.float32),
        grid=(n_pad // tile_n,),
        in_specs=[
            pl.BlockSpec((k, tile_n), lambda i: (0, i)),
            pl.BlockSpec((c, k), lambda i: (0, 0)),
            pl.BlockSpec((c, 1), lambda i: (0, 0)),
        ],
        out_specs=pl.BlockSpec((c, tile_n), lambda i: (0, i)),
        compiler_params=pltpu.CompilerParams(
            dimension_semantics=("parallel",),
            vmem_limit_bytes=_VMEM_LIMIT_BYTES),
    )(x_t, w, bias_col)


# ---------------------------------------------------------------------------
# Host-side glue: im2col patch extraction fused with the 2x2 pool decomposition
# ---------------------------------------------------------------------------
def pooled_conv_patches(act, k, po, m_pad):
    """act: (Cin, H, W, N) bf16 -> (4*Cin*k*k, m_pad) bf16.

    Rows: pool-tap major (a, b), then (cin, kh, kw) -- matches the block-diagonal
    weight / PyTorch reshape order.  Columns: (oh, ow, n) pixel-major,
    batch-minor, so every downstream flatten is a pure reshape (no transpose).
    Strided slices rely on Python clamping at the image edge; asserts guard it.
    """
    cin, _, _, n = act.shape
    m = po * po * n
    taps = []
    for a in range(2):
        for b in range(2):
            feats = []
            for kh in range(k):
                for kw in range(k):
                    s = act[:, a + kh: a + kh + 2 * po: 2,
                                 b + kw: b + kw + 2 * po: 2, :]
                    assert s.shape == (cin, po, po, n), s.shape
                    feats.append(s.reshape(cin, 1, m))
            taps.append(jnp.concatenate(feats, axis=1).reshape(cin * k * k, m))
    p = jnp.concatenate(taps, axis=0)                        # (4*K, M)
    return jnp.pad(p, ((0, 0), (0, m_pad - m)))


def _tap_blockdiag_weight(w_flat, cpad):
    """(Cout, K) -> (4*cpad, 4*K), block-diagonal over the 4 pool taps.

    Cout is padded to cpad (a multiple of 8) so each tap's result-row group is
    sublane-tile aligned for the in-kernel VPU max."""
    cout, _ = w_flat.shape
    wp = jnp.zeros((cpad, w_flat.shape[1]), w_flat.dtype).at[:cout, :].set(w_flat)
    return jnp.kron(jnp.eye(4, dtype=w_flat.dtype), wp)


# ---------------------------------------------------------------------------
# Full forward pass (matches Net.forward semantics)
# ---------------------------------------------------------------------------
def net_forward(x_nchw, params):
    w1, b1, w2, b2, wfc, bfc = params
    f32, bf16 = jnp.float32, jnp.bfloat16
    n = x_nchw.shape[0]

    # Channel-major / batch-last activations; bf16 BEFORE the tap duplication.
    x_chwn = jnp.transpose(x_nchw, (1, 2, 3, 0)).astype(bf16)          # (1, 28, 28, N)

    # conv1 (1->12, k=3) + maxpool2 -> (12, 13*13*N) bf16
    m1 = 13 * 13 * n
    t1 = _pick_tile(m1, _CONV1_TILE_CAP)
    m1_pad = _round_up(m1, t1)
    p1 = pooled_conv_patches(x_chwn, 3, 13, m1_pad)                    # (36, m1_pad)
    w1_bd = _tap_blockdiag_weight(w1.reshape(12, 9), 16).astype(bf16)  # (64, 36)
    h1 = conv_pool(p1, w1_bd, b1.reshape(12, 1).astype(f32), 12, t1)   # (12, m1_pad)
    h1_chwn = h1[:, :m1].reshape(12, 13, 13, n)

    # conv2 (12->24, k=2) + maxpool2 -> (24, 6*6*N) bf16
    m2 = 6 * 6 * n
    t2 = _pick_tile(m2, _CONV2_TILE_CAP)
    m2_pad = _round_up(m2, t2)
    p2 = pooled_conv_patches(h1_chwn, 2, 6, m2_pad)                    # (192, m2_pad)
    w2_bd = _tap_blockdiag_weight(w2.reshape(24, 48), 24).astype(bf16) # (96, 192)
    h2 = conv_pool(p2, w2_bd, b2.reshape(24, 1).astype(f32), 24, t2)   # (24, m2_pad)

    # flatten exactly like x.view(-1, 24*6*6): with (oh, ow, n) batch-minor
    # columns, feature index c*36+oh*6+ow is a pure reshape -- no transpose.
    feats_t = h2[:, :m2].reshape(24 * 36, n)                           # (864, N) bf16
    tn = _pick_tile(n, _FC_TILE_CAP)
    n_pad = _round_up(n, tn)
    feats_t = jnp.pad(feats_t, ((0, 0), (0, n_pad - n)))

    out = linear(feats_t, wfc.astype(bf16),
                 bfc.reshape(10, 1).astype(f32), tn)                   # (10, n_pad) f32
    return out[:, :n].T                                                # (N, 10)


# ---------------------------------------------------------------------------
# Pure-JAX (XLA, f32) reference for the correctness check
# ---------------------------------------------------------------------------
def ref_forward(x_nchw, params):
    w1, b1, w2, b2, wfc, bfc = params
    dn = ("NCHW", "OIHW", "NCHW")
    y = jax.lax.conv_general_dilated(x_nchw, w1, (1, 1), "VALID",
                                     dimension_numbers=dn)
    y = y + b1[None, :, None, None]
    y = jax.lax.reduce_window(y, -jnp.inf, jax.lax.max,
                              (1, 1, 2, 2), (1, 1, 2, 2), "VALID")
    y = jax.lax.conv_general_dilated(y, w2, (1, 1), "VALID",
                                     dimension_numbers=dn)
    y = y + b2[None, :, None, None]
    y = jax.lax.reduce_window(y, -jnp.inf, jax.lax.max,
                              (1, 1, 2, 2), (1, 1, 2, 2), "VALID")
    y = y.reshape(y.shape[0], -1)
    return y @ wfc.T + bfc


if __name__ == "__main__":
    key = jax.random.PRNGKey(0)
    ks = jax.random.split(key, 7)

    # deterministic synthetic parameters (shapes from Net.__init__)
    w1 = jax.random.normal(ks[0], (12, 1, 3, 3), jnp.float32) * 0.2
    b1 = jax.random.normal(ks[1], (12,), jnp.float32) * 0.1
    w2 = jax.random.normal(ks[2], (24, 12, 2, 2), jnp.float32) * 0.1
    b2 = jax.random.normal(ks[3], (24,), jnp.float32) * 0.1
    wfc = jax.random.normal(ks[4], (10, 24 * 6 * 6), jnp.float32) * 0.02
    bfc = jax.random.normal(ks[5], (10,), jnp.float32) * 0.1
    params = (w1, b1, w2, b2, wfc, bfc)

    # MNIST-style input fixed by the architecture (fc1 expects 24*6*6)
    x = jax.random.normal(ks[6], (2, 1, 28, 28), jnp.float32)

    out = jax.block_until_ready(jax.jit(net_forward)(x, params))
    ref = jax.block_until_ready(ref_forward(x, params))

    assert out.shape == (2, 10)
    # bf16 operands/intermediates (f32 accumulation) vs a pure-f32 XLA reference.
    max_err = float(jnp.max(jnp.abs(out - ref)))
    assert jnp.allclose(out, ref, rtol=5e-2, atol=5e-2), (
        f"mismatch vs XLA reference (max abs err {max_err})")

    print("KERNEL_OK")
</pallas_src>

<mosaic_0001>
module attributes {stable_mosaic.version = 11 : i64} {
  func.func @_conv_pool_kernel(%arg0: i32, %arg1: memref<36x256xbf16, #tpu.memory_space<vmem>>, %arg2: memref<64x36xbf16, #tpu.memory_space<vmem>>, %arg3: memref<12x1xf32, #tpu.memory_space<vmem>>, %arg4: memref<12x256xbf16, #tpu.memory_space<vmem>>) attributes {dimension_semantics = [#tpu.dimension_semantics<parallel>], iteration_bounds = array<i64: 2>, scalar_prefetch = 0 : i64, scratch_operands = 0 : i64, tpu.core_type = #tpu.core_type<tc>, window_params = [{transform_indices = @transform_0, window_bounds = array<i64: 36, 256>}, {pipeline_mode = #tpu.pipeline_mode<synchronous>, transform_indices = @transform_1, window_bounds = array<i64: 64, 36>}, {pipeline_mode = #tpu.pipeline_mode<synchronous>, transform_indices = @transform_2, window_bounds = array<i64: 12, 1>}, {transform_indices = @transform_3, window_bounds = array<i64: 12, 256>}]} {
    %c0 = arith.constant 0 : index
    %c0_0 = arith.constant 0 : index
    %0 = vector.load %arg2[%c0, %c0_0] : memref<64x36xbf16, #tpu.memory_space<vmem>>, vector<64x36xbf16>
    %c0_1 = arith.constant 0 : index
    %c0_2 = arith.constant 0 : index
    %1 = vector.load %arg1[%c0_1, %c0_2] : memref<36x256xbf16, #tpu.memory_space<vmem>>, vector<36x256xbf16>
    %cst = arith.constant dense<0.000000e+00> : vector<64x256xf32>
    %2 = tpu.matmul %0, %1, %cst {dimension_numbers = #tpu.dot_dimension_numbers<[1], [0], [0], [1], [0, 0, 1, 1], [], []>} : vector<64x36xbf16>, vector<36x256xbf16>, vector<64x256xf32> -> vector<64x256xf32>
    %3 = vector.extract_strided_slice %2 {offsets = [0, 0], sizes = [16, 256], strides = [1, 1]} : vector<64x256xf32> to vector<16x256xf32>
    %4 = vector.extract_strided_slice %2 {offsets = [16, 0], sizes = [16, 256], strides = [1, 1]} : vector<64x256xf32> to vector<16x256xf32>
    %5 = arith.maximumf %3, %4 : vector<16x256xf32>
    %6 = vector.extract_strided_slice %2 {offsets = [32, 0], sizes = [16, 256], strides = [1, 1]} : vector<64x256xf32> to vector<16x256xf32>
    %7 = arith.maximumf %5, %6 : vector<16x256xf32>
    %8 = vector.extract_strided_slice %2 {offsets = [48, 0], sizes = [16, 256], strides = [1, 1]} : vector<64x256xf32> to vector<16x256xf32>
    %9 = arith.maximumf %7, %8 : vector<16x256xf32>
    %10 = vector.extract_strided_slice %9 {offsets = [0, 0], sizes = [12, 256], strides = [1, 1]} : vector<16x256xf32> to vector<12x256xf32>
    %c0_3 = arith.constant 0 : index
    %c0_4 = arith.constant 0 : index
    %11 = vector.load %arg3[%c0_3, %c0_4] : memref<12x1xf32, #tpu.memory_space<vmem>>, vector<12x1xf32>
    %12 = vector.broadcast %11 : vector<12x1xf32> to vector<12x256xf32>
    %13 = arith.addf %10, %12 : vector<12x256xf32>
    %14 = arith.truncf %13 : vector<12x256xf32> to vector<12x256xbf16>
    %c0_5 = arith.constant 0 : index
    %c0_6 = arith.constant 0 : index
    %15 = vector.load %arg4[%c0_5, %c0_6] : memref<12x256xbf16, #tpu.memory_space<vmem>>, vector<12x256xbf16>
    tpu.vector_store %arg4[%c0_5, %c0_6], %14 {strides = array<i32>} : memref<12x256xbf16, #tpu.memory_space<vmem>>, vector<12x256xbf16>,
    return
  }
  func.func @transform_0(%arg0: i32) -> (i32, i32) {
    %c0_i32 = arith.constant 0 : i32
    %c0_i32_0 = arith.constant 0 : i32
    return %c0_i32, %arg0 : i32, i32
  }
  func.func @transform_1(%arg0: i32) -> (i32, i32) {
    %c0_i32 = arith.constant 0 : i32
    %c0_i32_0 = arith.constant 0 : i32
    %c0_i32_1 = arith.constant 0 : i32
    return %c0_i32, %c0_i32_0 : i32, i32
  }
  func.func @transform_2(%arg0: i32) -> (i32, i32) {
    %c0_i32 = arith.constant 0 : i32
    %c0_i32_0 = arith.constant 0 : i32
    %c0_i32_1 = arith.constant 0 : i32
    return %c0_i32, %c0_i32_0 : i32, i32
  }
  func.func @transform_3(%arg0: i32) -> (i32, i32) {
    %c0_i32 = arith.constant 0 : i32
    %c0_i32_0 = arith.constant 0 : i32
    return %c0_i32, %arg0 : i32, i32
  }
}

module attributes {stable_mosaic.version = 11 : i64} {
  func.func @_conv_pool_kernel(%arg0: i32, %arg1: memref<192x128xbf16, #tpu.memory_space<vmem>>, %arg2: memref<96x192xbf16, #tpu.memory_space<vmem>>, %arg3: memref<24x1xf32, #tpu.memory_space<vmem>>, %arg4: memref<24x128xbf16, #tpu.memory_space<vmem>>) attributes {dimension_semantics = [#tpu.dimension_semantics<parallel>], iteration_bounds = array<i64: 1>, scalar_prefetch = 0 : i64, scratch_operands = 0 : i64, tpu.core_type = #tpu.core_type<tc>, window_params = [{transform_indices = @transform_0, window_bounds = array<i64: 192, 128>}, {pipeline_mode = #tpu.pipeline_mode<synchronous>, transform_indices = @transform_1, window_bounds = array<i64: 96, 192>}, {pipeline_mode = #tpu.pipeline_mode<synchronous>, transform_indices = @transform_2, window_bounds = array<i64: 24, 1>}, {transform_indices = @transform_3, window_bounds = array<i64: 24, 128>}]} {
    %c0 = arith.constant 0 : index
    %c0_0 = arith.constant 0 : index
    %0 = vector.load %arg2[%c0, %c0_0] : memref<96x192xbf16, #tpu.memory_space<vmem>>, vector<96x192xbf16>
    %c0_1 = arith.constant 0 : index
    %c0_2 = arith.constant 0 : index
    %1 = vector.load %arg1[%c0_1, %c0_2] : memref<192x128xbf16, #tpu.memory_space<vmem>>, vector<192x128xbf16>
    %cst = arith.constant dense<0.000000e+00> : vector<96x128xf32>
    %2 = tpu.matmul %0, %1, %cst {dimension_numbers = #tpu.dot_dimension_numbers<[1], [0], [0], [1], [0, 0, 1, 1], [], []>} : vector<96x192xbf16>, vector<192x128xbf16>, vector<96x128xf32> -> vector<96x128xf32>
    %3 = vector.extract_strided_slice %2 {offsets = [0, 0], sizes = [24, 128], strides = [1, 1]} : vector<96x128xf32> to vector<24x128xf32>
    %4 = vector.extract_strided_slice %2 {offsets = [24, 0], sizes = [24, 128], strides = [1, 1]} : vector<96x128xf32> to vector<24x128xf32>
    %5 = arith.maximumf %3, %4 : vector<24x128xf32>
    %6 = vector.extract_strided_slice %2 {offsets = [48, 0], sizes = [24, 128], strides = [1, 1]} : vector<96x128xf32> to vector<24x128xf32>
    %7 = arith.maximumf %5, %6 : vector<24x128xf32>
    %8 = vector.extract_strided_slice %2 {offsets = [72, 0], sizes = [24, 128], strides = [1, 1]} : vector<96x128xf32> to vector<24x128xf32>
    %9 = arith.maximumf %7, %8 : vector<24x128xf32>
    %c0_3 = arith.constant 0 : index
    %c0_4 = arith.constant 0 : index
    %10 = vector.load %arg3[%c0_3, %c0_4] : memref<24x1xf32, #tpu.memory_space<vmem>>, vector<24x1xf32>
    %11 = vector.broadcast %10 : vector<24x1xf32> to vector<24x128xf32>
    %12 = arith.addf %9, %11 : vector<24x128xf32>
    %13 = arith.truncf %12 : vector<24x128xf32> to vector<24x128xbf16>
    %c0_5 = arith.constant 0 : index
    %c0_6 = arith.constant 0 : index
    %14 = vector.load %arg4[%c0_5, %c0_6] : memref<24x128xbf16, #tpu.memory_space<vmem>>, vector<24x128xbf16>
    tpu.vector_store %arg4[%c0_5, %c0_6], %13 {strides = array<i32>} : memref<24x128xbf16, #tpu.memory_space<vmem>>, vector<24x128xbf16>,
    return
  }
  func.func @transform_0(%arg0: i32) -> (i32, i32) {
    %c0_i32 = arith.constant 0 : i32
    %c0_i32_0 = arith.constant 0 : i32
    return %c0_i32, %arg0 : i32, i32
  }
  func.func @transform_1(%arg0: i32) -> (i32, i32) {
    %c0_i32 = arith.constant 0 : i32
    %c0_i32_0 = arith.constant 0 : i32
    %c0_i32_1 = arith.constant 0 : i32
    return %c0_i32, %c0_i32_0 : i32, i32
  }
  func.func @transform_2(%arg0: i32) -> (i32, i32) {
    %c0_i32 = arith.constant 0 : i32
    %c0_i32_0 = arith.constant 0 : i32
    %c0_i32_1 = arith.constant 0 : i32
    return %c0_i32, %c0_i32_0 : i32, i32
  }
  func.func @transform_3(%arg0: i32) -> (i32, i32) {
    %c0_i32 = arith.constant 0 : i32
    %c0_i32_0 = arith.constant 0 : i32
    return %c0_i32, %arg0 : i32, i32
  }
}

module attributes {stable_mosaic.version = 11 : i64} {
  func.func @_linear_kernel(%arg0: i32, %arg1: memref<864x128xbf16, #tpu.memory_space<vmem>>, %arg2: memref<10x864xbf16, #tpu.memory_space<vmem>>, %arg3: memref<10x1xf32, #tpu.memory_space<vmem>>, %arg4: memref<10x128xf32, #tpu.memory_space<vmem>>) attributes {dimension_semantics = [#tpu.dimension_semantics<parallel>], iteration_bounds = array<i64: 1>, scalar_prefetch = 0 : i64, scratch_operands = 0 : i64, tpu.core_type = #tpu.core_type<tc>, window_params = [{transform_indices = @transform_0, window_bounds = array<i64: 864, 128>}, {pipeline_mode = #tpu.pipeline_mode<synchronous>, transform_indices = @transform_1, window_bounds = array<i64: 10, 864>}, {pipeline_mode = #tpu.pipeline_mode<synchronous>, transform_indices = @transform_2, window_bounds = array<i64: 10, 1>}, {transform_indices = @transform_3, window_bounds = array<i64: 10, 128>}]} {
    %c0 = arith.constant 0 : index
    %c0_0 = arith.constant 0 : index
    %0 = vector.load %arg2[%c0, %c0_0] : memref<10x864xbf16, #tpu.memory_space<vmem>>, vector<10x864xbf16>
    %c0_1 = arith.constant 0 : index
    %c0_2 = arith.constant 0 : index
    %1 = vector.load %arg1[%c0_1, %c0_2] : memref<864x128xbf16, #tpu.memory_space<vmem>>, vector<864x128xbf16>
    %cst = arith.constant dense<0.000000e+00> : vector<10x128xf32>
    %2 = tpu.matmul %0, %1, %cst {dimension_numbers = #tpu.dot_dimension_numbers<[1], [0], [0], [1], [0, 0, 1, 1], [], []>} : vector<10x864xbf16>, vector<864x128xbf16>, vector<10x128xf32> -> vector<10x128xf32>
    %c0_3 = arith.constant 0 : index
    %c0_4 = arith.constant 0 : index
    %3 = vector.load %arg3[%c0_3, %c0_4] : memref<10x1xf32, #tpu.memory_space<vmem>>, vector<10x1xf32>
    %4 = vector.broadcast %3 : vector<10x1xf32> to vector<10x128xf32>
    %5 = arith.addf %2, %4 : vector<10x128xf32>
    %c0_5 = arith.constant 0 : index
    %c0_6 = arith.constant 0 : index
    %6 = vector.load %arg4[%c0_5, %c0_6] : memref<10x128xf32, #tpu.memory_space<vmem>>, vector<10x128xf32>
    tpu.vector_store %arg4[%c0_5, %c0_6], %5 {strides = array<i32>} : memref<10x128xf32, #tpu.memory_space<vmem>>, vector<10x128xf32>,
    return
  }
  func.func @transform_0(%arg0: i32) -> (i32, i32) {
    %c0_i32 = arith.constant 0 : i32
    %c0_i32_0 = arith.constant 0 : i32
    return %c0_i32, %arg0 : i32, i32
  }
  func.func @transform_1(%arg0: i32) -> (i32, i32) {
    %c0_i32 = arith.constant 0 : i32
    %c0_i32_0 = arith.constant 0 : i32
    %c0_i32_1 = arith.constant 0 : i32
    return %c0_i32, %c0_i32_0 : i32, i32
  }
  func.func @transform_2(%arg0: i32) -> (i32, i32) {
    %c0_i32 = arith.constant 0 : i32
    %c0_i32_0 = arith.constant 0 : i32
    %c0_i32_1 = arith.constant 0 : i32
    return %c0_i32, %c0_i32_0 : i32, i32
  }
  func.func @transform_3(%arg0: i32) -> (i32, i32) {
    %c0_i32 = arith.constant 0 : i32
    %c0_i32_0 = arith.constant 0 : i32
    return %c0_i32, %arg0 : i32, i32
  }
}

</mosaic_0001>

<llo_original>
// kernel: net_forward.3
$region0: #{net_forward.3}
  #allocation0 [shape = 'u32[]', space=smem, size = 0x4, offset = 0x4, fixed_abs, tag = 'smem constant byte address 0x4 - core index']
  #allocation1 [shape = 'u32[72,128]{1,0:T(1,128)}', space=vmem, size = 0x9000, scoped, tag = 'internal scratch']
  %s0 = inlined_call_operand.vmem [shape: bf16[36,512], index: 0, kind: input, shape index: {}]
  %s1 = inlined_call_operand.vmem [shape: bf16[64,36], index: 1, kind: input, shape index: {}]
  %s2 = inlined_call_operand.vmem [shape: f32[12,1], index: 2, kind: input, shape index: {}]
  %s3 = inlined_call_operand.vmem [shape: bf16[12,512], index: 3, kind: output, shape index: {}]
  %s4 = sld [smem:[#allocation0]]
  $region117: #{net_forward.3} parent=0
    _
  %s6 = ssub.s32 1, %s4
  %s7 = scalar_select 0, %s6, %s4
  $region1: #{net_forward.3} parent=0
    #allocation2 [shape = 'u8[40960]{0}', space=vmem, size = 0xa000, scoped, tag = 'input window, operand 0']
    #allocation3 [shape = 'u8[16384]{0}', space=vmem, size = 0x4000, scoped, tag = 'output window, operand 0']
    loop: start=0, step=1, limit=4
    $region2: #{net_forward.3} parent=1 // loop_pre_header
      _
    $region3: #{net_forward.3} parent=1 // loop_header
      %s9 = sphi 0, %s13
      %p10 = scmp.ge.s32.totalorder %s9, 4
      %s19 = sphi 0, %s21
      %s22 = sphi 0, %s19
      %s23 = sphi 0, %s22
      %s39 = sphi 0, %s23
      %s43 = sphi 0, %s43
      %s45 = sphi 0, %s43
      %s46 = sphi 0, %s45
      %s60 = sphi 0, %s46
      %s64 = sphi 0, %s64
      %s66 = sphi 0, %s64
      %s67 = sphi 0, %s66
      %s81 = sphi 0, %s67
      %s87 = sphi 0, %s89
      %s90 = sphi 0, %s87
      %s91 = sphi 0, %s90
      %s107 = sphi 0, %s91
    $region4: #{net_forward.3} parent=1 // loop_header_branch
      %12 = sbr.rel (%p10) target = $region8
    $region5: #{net_forward.3} parent=1 // loop_body
      %s14 = ssub.s32 %s9, 1
      %s15 = ssub.s32 %s9, 2
      %s16 = sadd.s32 %s9, 1
      %s17 = ssub.s32 %s9, %s16
      %p18 = scmp.eq.s32.totalorder %s17, 0
      %s20 = sadd.s32 %s19, 1
      %s21 = scalar_select %p18, %s19, %s20
      %p24 = pneg %p18
      %p25 = scmp.eq.s32.totalorder %s9, 1
      %p26 = por %p24, %p25
      %p27 = scmp.ne.s32.totalorder %s19, %s22
      %p28 = scmp.eq.s32.totalorder %s9, 0
      %p29 = por %p27, %p28
      %p30 = scmp.ne.s32.totalorder %s19, %s22
      %p31 = scmp.eq.s32.totalorder %s14, 1
      %p32 = por %p30, %p31
      %p33 = scmp.ne.s32.totalorder %s22, %s23
      %p34 = scmp.eq.s32.totalorder %s14, 0
      %p35 = por %p33, %p34
      %p36 = scmp.ne.s32.totalorder %s22, %s23
      %p37 = scmp.eq.s32.totalorder %s15, 1
      %p38 = por %p36, %p37
      %p40 = scmp.ne.s32.totalorder %s23, %s39
      %p41 = scmp.eq.s32.totalorder %s15, 0
      %p42 = por %p40, %p41
      %s44 = sadd.s32 %s43, 1
      %p47 = scmp.eq.s32.totalorder %s9, 1
      %p48 = scmp.ne.s32.totalorder %s43, %s45
      %p49 = scmp.eq.s32.totalorder %s9, 0
      %p50 = por %p48, %p49
      %p51 = scmp.ne.s32.totalorder %s43, %s45
      %p52 = scmp.eq.s32.totalorder %s14, 1
      %p53 = por %p51, %p52
      %p54 = scmp.ne.s32.totalorder %s45, %s46
      %p55 = scmp.eq.s32.totalorder %s14, 0
      %p56 = por %p54, %p55
      %p57 = scmp.ne.s32.totalorder %s45, %s46
      %p58 = scmp.eq.s32.totalorder %s15, 1
      %p59 = por %p57, %p58
      %p61 = scmp.ne.s32.totalorder %s46, %s60
      %p62 = scmp.eq.s32.totalorder %s15, 0
      %p63 = por %p61, %p62
      %s65 = sadd.s32 %s64, 1
      %p68 = scmp.eq.s32.totalorder %s9, 1
      %p69 = scmp.ne.s32.totalorder %s64, %s66
      %p70 = scmp.eq.s32.totalorder %s9, 0
      %p71 = por %p69, %p70
      %p72 = scmp.ne.s32.totalorder %s64, %s66
      %p73 = scmp.eq.s32.totalorder %s14, 1
      %p74 = por %p72, %p73
      %p75 = scmp.ne.s32.totalorder %s66, %s67
      %p76 = scmp.eq.s32.totalorder %s14, 0
      %p77 = por %p75, %p76
      %p78 = scmp.ne.s32.totalorder %s66, %s67
      %p79 = scmp.eq.s32.totalorder %s15, 1
      %p80 = por %p78, %p79
      %p82 = scmp.ne.s32.totalorder %s67, %s81
      %p83 = scmp.eq.s32.totalorder %s15, 0
      %p84 = por %p82, %p83
      %s85 = ssub.s32 %s9, %s16
      %p86 = scmp.eq.s32.totalorder %s85, 0
      %s88 = sadd.s32 %s87, 1
      %s89 = scalar_select %p86, %s87, %s88
      %p92 = pneg %p86
      %p93 = scmp.eq.s32.totalorder %s9, 1
      %p94 = por %p92, %p93
      %p95 = scmp.ne.s32.totalorder %s87, %s90
      %p96 = scmp.eq.s32.totalorder %s9, 0
      %p97 = por %p95, %p96
      %p98 = scmp.ne.s32.totalorder %s87, %s90
      %p99 = scmp.eq.s32.totalorder %s14, 1
      %p100 = por %p98, %p99
      %p101 = scmp.ne.s32.totalorder %s90, %s91
      %p102 = scmp.eq.s32.totalorder %s14, 0
      %p103 = por %p101, %p102
      %p104 = scmp.ne.s32.totalorder %s90, %s91
      %p105 = scmp.eq.s32.totalorder %s15, 1
      %p106 = por %p104, %p105
      %p108 = scmp.ne.s32.totalorder %s91, %s107
      %p109 = scmp.eq.s32.totalorder %s15, 0
      %p110 = por %p108, %p109
      %p111 = scmp.le.s32.totalorder 1, %s9
      %p112 = scmp.lt.s32.totalorder %s9, 3
      %p113 = pnand %p111, %p112
      %p114 = pneg %p113
      // Predicated region
      $region9: #{net_forward.3} parent=5 // pred_check
        _
      $region10: #{net_forward.3} parent=5 // pred_check_branch
        %116 = sbr.rel (%p113) target = $region12
      $region11: #{net_forward.3} parent=5 // pred_region
        %s117 = ssub.s32 %s9, 1
        // Predicated region
        $region13: #{net_forward.3} parent=11 // pred_check
          %p118 = pneg %p56
        $region14: #{net_forward.3} parent=11 // pred_check_branch
          %120 = sbr.rel (%p118) target = $region16
        $region15: #{net_forward.3} parent=11 // pred_region
          _
        $region16: #{net_forward.3} parent=11 // pred_fallthru
          _
        // Predicated region
        $region17: #{net_forward.3} parent=11 // pred_check
          %p121 = pneg %p77
        $region18: #{net_forward.3} parent=11 // pred_check_branch
          %123 = sbr.rel (%p121) target = $region20
        $region19: #{net_forward.3} parent=11 // pred_region
          _
        $region20: #{net_forward.3} parent=11 // pred_fallthru
          _
      $region12: #{net_forward.3} parent=5 // pred_fallthru
        _
      %p124 = scmp.lt.s32.totalorder %s9, 2
      // Predicated region
      $region21: #{net_forward.3} parent=5 // pred_check
        %p125 = pneg %p124
      $region22: #{net_forward.3} parent=5 // pred_check_branch
        %127 = sbr.rel (%p125) target = $region24
      $region23: #{net_forward.3} parent=5 // pred_region
        // Predicated region
        $region25: #{net_forward.3} parent=23 // pred_check
          %p128 = pneg %p29
        $region26: #{net_forward.3} parent=23 // pred_check_branch
          %130 = sbr.rel (%p128) target = $region28
        $region27: #{net_forward.3} parent=23 // pred_region
          %s131 = sand.u32 %s19, 1
          %s132 = sand.u32 %s19, 1
          %s133 = smul.addr %s132, 40
          %s134 = scalar_lea.vmem [#allocation2], %s133
          %s135 = smul.u32 2, %s9
          %s136 = smul.addr %s135, 4
          %s137 = scalar_lea.vmem %s0, %s136
          // Predicated region
          $region29: #{net_forward.3} parent=27 // pred_check
            _
          $region30: #{net_forward.3} parent=27 // pred_check_branch
            %139 = sbr.rel (0) target = $region32
          $region31: #{net_forward.3} parent=27 // pred_region
            // Predicated region
            $region33: #{net_forward.3} parent=31 // pred_check
              _
            $region34: #{net_forward.3} parent=31 // pred_check_branch
              %141 = sbr.rel (0) target = $region36
            $region35: #{net_forward.3} parent=31 // pred_region
              // Predicated region
              $region48: #{net_forward.3} parent=35 // pred_check
                _
              $region49: #{net_forward.3} parent=35 // pred_check_branch
                %165 = sbr.rel (0) target = $region51
              $region50: #{net_forward.3} parent=35 // pred_region
                loop: start=0, step=1, limit=1
                $region52: #{net_forward.3} parent=50 // loop_pre_header
                  _
                $region53: #{net_forward.3} parent=50 // loop_header
                  %s167 = sphi 0, %s171
                  %p168 = scmp.ge.s32.totalorder %s167, 1
                  %s172 = sphi %s137, %s137
                  %s173 = sphi %s134, %s134
                $region54: #{net_forward.3} parent=50 // loop_header_branch
                  %170 = sbr.rel (%p168) target = $region58
                $region55: #{net_forward.3} parent=50 // loop_body
                  %v174 = vld [vmem:[%s172] sm:$0xff]
                  %175 = vst [vmem:[%s173] sm:$0xff] %v174
                  %v176 = vld [vmem:[%s172 + $0x10] sm:$0xff]
                  %177 = vst [vmem:[%s173 + $0x8] sm:$0xff] %v176
                  %v178 = vld [vmem:[%s172 + $0x20] sm:$0xff]
                  %179 = vst [vmem:[%s173 + $0x10] sm:$0xff] %v178
                  %v180 = vld [vmem:[%s172 + $0x30] sm:$0xff]
                  %181 = vst [vmem:[%s173 + $0x18] sm:$0xff] %v180
                  %v182 = vld [vmem:[%s172 + $0x40] sm:$0xff]
                  %183 = vst [vmem:[%s173 + $0x20] sm:$0xff] %v182
                $region56: #{net_forward.3} parent=50 // loop_footer
                  %s171 = sadd.s32 1, %s167
                $region57: #{net_forward.3} parent=50 // loop_footer_branch
                  %166 = sbr.rel target = $region53
                $region58: #{net_forward.3} parent=50 // loop_exit
                  _
              $region51: #{net_forward.3} parent=35 // pred_fallthru
                _
              // Predicated region
              $region59: #{net_forward.3} parent=35 // pred_check
                _
              $region60: #{net_forward.3} parent=35 // pred_check_branch
                %185 = sbr.rel target = $region62
              $region61: #{net_forward.3} parent=35 // pred_region
                _
              $region62: #{net_forward.3} parent=35 // pred_fallthru
                _
            $region36: #{net_forward.3} parent=31 // pred_fallthru
              _
            // Predicated region
            $region37: #{net_forward.3} parent=31 // pred_check
              _
            $region38: #{net_forward.3} parent=31 // pred_check_branch
              %143 = sbr.rel target = $region40
            $region39: #{net_forward.3} parent=31 // pred_region
              %s145 = ssub.s32 256, 1
              loop: start=0, step=1, limit=1
              $region41: #{net_forward.3} parent=39 // loop_pre_header
                _
              $region42: #{net_forward.3} parent=39 // loop_header
                %s147 = sphi 0, %s151
                %p148 = scmp.ge.s32.totalorder %s147, 1
                %s152 = sphi %s137, %s137
                %s153 = sphi %s134, %s134
              $region43: #{net_forward.3} parent=39 // loop_header_branch
                %150 = sbr.rel (%p148) target = $region47
              $region44: #{net_forward.3} parent=39 // loop_body
                %v154 = vld [vmem:[%s152] sm:%s145]
                %155 = vst [vmem:[%s153] sm:%s145] %v154
                %v156 = vld [vmem:[%s152 + $0x10] sm:%s145]
                %157 = vst [vmem:[%s153 + $0x8] sm:%s145] %v156
                %v158 = vld [vmem:[%s152 + $0x20] sm:%s145]
                %159 = vst [vmem:[%s153 + $0x10] sm:%s145] %v158
                %v160 = vld [vmem:[%s152 + $0x30] sm:%s145]
                %161 = vst [vmem:[%s153 + $0x18] sm:%s145] %v160
                %v162 = vld [vmem:[%s152 + $0x40] sm:%s145]
                %163 = vst [vmem:[%s153 + $0x20] sm:%s145] %v162
              $region45: #{net_forward.3} parent=39 // loop_footer
                %s151 = sadd.s32 1, %s147
              $region46: #{net_forward.3} parent=39 // loop_footer_branch
                %146 = sbr.rel target = $region42
              $region47: #{net_forward.3} parent=39 // loop_exit
                _
            $region40: #{net_forward.3} parent=31 // pred_fallthru
              _
          $region32: #{net_forward.3} parent=27 // pred_fallthru
            _
          %186 = vnop
        $region28: #{net_forward.3} parent=23 // pred_fallthru
          _
      $region24: #{net_forward.3} parent=5 // pred_fallthru
        _
      %p187 = scmp.le.s32.totalorder 1, %s9
      %p188 = scmp.lt.s32.totalorder %s9, 3
      %p189 = pnand %p187, %p188
      %p190 = pneg %p189
      // Predicated region
      $region63: #{net_forward.3} parent=5 // pred_check
        _
      $region64: #{net_forward.3} parent=5 // pred_check_branch
        %192 = sbr.rel (%p189) target = $region66
      $region65: #{net_forward.3} parent=5 // pred_region
        %s193 = ssub.s32 %s9, 1
        %s194 = sand.u32 %s22, 1
        %s195 = sand.u32 %s22, 1
        %s196 = smul.addr %s195, 40
        %s197 = scalar_lea.vmem [#allocation2], %s196
        // Predicated region
        $region67: #{net_forward.3} parent=65 // pred_check
          %p198 = pneg %p35
        $region68: #{net_forward.3} parent=65 // pred_check_branch
          %200 = sbr.rel (%p198) target = $region70
        $region69: #{net_forward.3} parent=65 // pred_region
          _
        $region70: #{net_forward.3} parent=65 // pred_fallthru
          _
        %s201 = sand.u32 %s22, 1
        %s202 = sand.u32 %s22, 1
        %s203 = smul.addr %s202, 40
        %s204 = scalar_lea.vmem [#allocation2], %s203
        %p205 = pneg %p35
        %p206 = pneg %p32
        %p207 = pneg %p56
        %p208 = pneg %p53
        %p209 = pneg %p77
        %p210 = pneg %p74
        %p211 = pneg %p103
        %p212 = pneg %p100
        %s213 = sand.u32 %s90, 1
        %s214 = sand.u32 %s90, 1
        %s215 = smul.addr %s214, 16
        %s216 = scalar_lea.vmem [#allocation3], %s215
        %s217 = smul.u32 2, %s14
        %s218 = smul.u32 2, %s14
        %v220 = vld [vmem:[%s1] sm:$0xf]
        %v221 = vld [vmem:[%s1 + $0x4] sm:$0xf]
        %v222 = vld [vmem:[%s1 + $0x8] sm:$0xf]
        %v223 = vld [vmem:[%s1 + $0xc] sm:$0xf]
        %v224 = vld [vmem:[%s1 + $0x10] sm:$0xf]
        %v225 = vld [vmem:[%s1 + $0x14] sm:$0xf]
        %v226 = vld [vmem:[%s1 + $0x18] sm:$0xf]
        %v227 = vld [vmem:[%s1 + $0x1c] sm:$0xf]
        %v228 = vld [vmem:[%s197] sm:$0xff]
        %v229 = vld [vmem:[%s197 + $0x8] sm:$0xff]
        %v230 = vld [vmem:[%s197 + $0x10] sm:$0xff]
        %v231 = vld [vmem:[%s197 + $0x18] sm:$0xff]
        %v232 = vld [vmem:[%s197 + $0x20] sm:$0x33]
        %v241 = vunpack.c.l.b16 %v220
        %v242 = vunpack.c.l.b16 %v221
        %v243 = vunpack.c.l.b16 %v222
        %v244 = vunpack.c.l.b16 %v223
        %v245 = vunpack.c.l.b16 %v224
        %v246 = vunpack.c.l.b16 %v225
        %v247 = vunpack.c.l.b16 %v226
        %v248 = vunpack.c.l.b16 %v227
        %v249 = vpack.c.b16 %v242, %v241
        %v250 = vpack.c.b16 %v244, %v243
        %v251 = vpack.c.b16 %v246, %v245
        %v252 = vpack.c.b16 %v248, %v247
        %v258 = vunpack.c.l.b16 %v228
        %v259 = vunpack.c.h.b16 %v228
        %v260 = vunpack.c.l.b16 %v229
        %v261 = vunpack.c.h.b16 %v229
        %v262 = vunpack.c.l.b16 %v230
        %v263 = vunpack.c.h.b16 %v230
        %v264 = vunpack.c.l.b16 %v231
        %v265 = vunpack.c.h.b16 %v231
        %v266 = vunpack.c.l.b16 %v232
        %v267 = vunpack.c.h.b16 %v232
        %v268 = vpack.c.b16 %v260, %v258
        %v269 = vpack.c.b16 %v261, %v259
        %v270 = vpack.c.b16 %v264, %v262
        %v271 = vpack.c.b16 %v265, %v263
        %v272 = vpack.c.b16 %v266, %v266
        %v273 = vpack.c.b16 %v267, %v267
        %vm278 = vcmask 293888
        %v280 = vsel %vm278, %v249, 0
        %v283 = vsel %vm278, %v250, 0
        %v286 = vsel %vm278, %v251, 0
        %v289 = vsel %vm278, %v252, 0
        %vm291 = vcmask 1041408
        %v293 = vsel %vm291, %v272, 0
        %v296 = vsel %vm291, %v273, 0
        %298 = vmatpush.bf16.msra.mxu0 0
        %299 = vmatpush.bf16.msra.mxu0 0
        %300 = vmatpush.bf16.msra.mxu0 0
        %301 = vmatpush.bf16.msra.mxu0 0
        %302 = vmatpush.bf16.msra.mxu0 0
        %303 = vmatpush.bf16.msra.mxu0 %v293
        %304 = vmatpush.bf16.msra.mxu0 %v270
        %305 = vmatpush.bf16.msra.mxu0 %v268
        %306 = vmatmul.bf16.gmra.mxu0 %v280
        %v307 = vpop.f32.mrf.mxu0
        %v308 = vadd.f32 0.0, %v307
        %v309 = vpop.f32.mrf.mxu0
        %v310 = vadd.f32 0.0, %v309
        %311 = vmatmul.bf16.gmra.mxu0 %v283
        %v312 = vpop.f32.mrf.mxu0
        %v313 = vadd.f32 0.0, %v312
        %v314 = vpop.f32.mrf.mxu0
        %v315 = vadd.f32 0.0, %v314
        %316 = vmatmul.bf16.gmra.mxu0 %v286
        %v317 = vpop.f32.mrf.mxu0
        %v318 = vadd.f32 0.0, %v317
        %v319 = vpop.f32.mrf.mxu0
        %v320 = vadd.f32 0.0, %v319
        %321 = vmatmul.bf16.gmra.mxu0 %v289
        %v322 = vpop.f32.mrf.mxu0
        %v323 = vadd.f32 0.0, %v322
        %v324 = vpop.f32.mrf.mxu0
        %v325 = vadd.f32 0.0, %v324
        %326 = vdwg.mxu0
        %327 = vmatpush.bf16.msra.mxu0 0
        %328 = vmatpush.bf16.msra.mxu0 0
        %329 = vmatpush.bf16.msra.mxu0 0
        %330 = vmatpush.bf16.msra.mxu0 0
        %331 = vmatpush.bf16.msra.mxu0 0
        %332 = vmatpush.bf16.msra.mxu0 %v296
        %333 = vmatpush.bf16.msra.mxu0 %v271
        %334 = vmatpush.bf16.msra.mxu0 %v269
        %335 = vmatmul.bf16.gmra.mxu0 %v280
        %v336 = vpop.f32.mrf.mxu0
        %v337 = vadd.f32 0.0, %v336
        %v338 = vpop.f32.mrf.mxu0
        %v339 = vadd.f32 0.0, %v338
        %340 = vmatmul.bf16.gmra.mxu0 %v283
        %v341 = vpop.f32.mrf.mxu0
        %v342 = vadd.f32 0.0, %v341
        %v343 = vpop.f32.mrf.mxu0
        %v344 = vadd.f32 0.0, %v343
        %345 = vmatmul.bf16.gmra.mxu0 %v286
        %v346 = vpop.f32.mrf.mxu0
        %v347 = vadd.f32 0.0, %v346
        %v348 = vpop.f32.mrf.mxu0
        %v349 = vadd.f32 0.0, %v348
        %350 = vmatmul.bf16.gmra.mxu0 %v289
        %v351 = vpop.f32.mrf.mxu0
        %v352 = vadd.f32 0.0, %v351
        %v353 = vpop.f32.mrf.mxu0
        %v354 = vadd.f32 0.0, %v353
        %355 = vdwg.mxu0
        %v356 = vmax.f32 %v308, %v313
        %v357 = vmax.f32 %v337, %v342
        %v358 = vmax.f32 %v310, %v315
        %v359 = vmax.f32 %v339, %v344
        %v360 = vmax.f32 %v356, %v318
        %v361 = vmax.f32 %v357, %v347
        %v362 = vmax.f32 %v358, %v320
        %v363 = vmax.f32 %v359, %v349
        %v364 = vmax.f32 %v360, %v323
        %v365 = vmax.f32 %v361, %v352
        %v366 = vmax.f32 %v362, %v325
        %v367 = vmax.f32 %v363, %v354
        %v368 = vld [vmem:[%s2] sm:$0xff]
        %v369 = vld [vmem:[%s2 + $0x8] sm:$0xf]
        %371 = vset.pattern.permute.xlu0 0
        %372 = vperm.xlu0 %371, %v368
        %v373 = vpop.permute.xlu0 %372
        %376 = vset.pattern.permute.xlu0 0
        %377 = vperm.xlu0 %376, %v369
        %v378 = vpop.permute.xlu0 %377
        %v380 = vadd.f32 %v364, %v373
        %v381 = vadd.f32 %v365, %v373
        %v382 = vadd.f32 %v366, %v378
        %v383 = vadd.f32 %v367, %v378
        %v384 = vpack.c.bf16 %v381, %v380
        %v385 = vpack.c.bf16 %v383, %v382
        %386 = vst [vmem:[%s216] sm:$0xff] %v384
        %387 = vst [vmem:[%s216 + $0x8] sm:$0x33] %v385
        %s388 = sand.u32 %s90, 1
        %s389 = sand.u32 %s90, 1
        %s390 = smul.addr %s389, 16
        %s391 = scalar_lea.vmem [#allocation3], %s390
        // Predicated region
        $region71: #{net_forward.3} parent=65 // pred_check
          %p392 = pneg %p100
        $region72: #{net_forward.3} parent=65 // pred_check_branch
          %394 = sbr.rel (%p392) target = $region74
        $region73: #{net_forward.3} parent=65 // pred_region
          %s395 = smul.u32 2, %s14
          %s396 = smul.addr %s395, 4
          %s397 = scalar_lea.vmem %s3, %s396
          // Predicated region
          $region75: #{net_forward.3} parent=73 // pred_check
            _
          $region76: #{net_forward.3} parent=73 // pred_check_branch
            %399 = sbr.rel (0) target = $region78
          $region77: #{net_forward.3} parent=73 // pred_region
            // Predicated region
            $region79: #{net_forward.3} parent=77 // pred_check
              _
            $region80: #{net_forward.3} parent=77 // pred_check_branch
              %401 = sbr.rel (0) target = $region82
            $region81: #{net_forward.3} parent=77 // pred_region
              // Predicated region
              $region94: #{net_forward.3} parent=81 // pred_check
                _
              $region95: #{net_forward.3} parent=81 // pred_check_branch
                %419 = sbr.rel (0) target = $region97
              $region96: #{net_forward.3} parent=81 // pred_region
                loop: start=0, step=1, limit=1
                $region98: #{net_forward.3} parent=96 // loop_pre_header
                  _
                $region99: #{net_forward.3} parent=96 // loop_header
                  %s421 = sphi 0, %s425
                  %p422 = scmp.ge.s32.totalorder %s421, 1
                  %s426 = sphi %s391, %s391
                  %s427 = sphi %s397, %s397
                $region100: #{net_forward.3} parent=96 // loop_header_branch
                  %424 = sbr.rel (%p422) target = $region104
                $region101: #{net_forward.3} parent=96 // loop_body
                  %v428 = vld [vmem:[%s426] sm:$0xff]
                  %429 = vst [vmem:[%s427] sm:$0xff] %v428
                  %v430 = vld [vmem:[%s426 + $0x8] sm:$0xff]
                  %431 = vst [vmem:[%s427 + $0x10] sm:$0xff] %v430
                $region102: #{net_forward.3} parent=96 // loop_footer
                  %s425 = sadd.s32 1, %s421
                $region103: #{net_forward.3} parent=96 // loop_footer_branch
                  %420 = sbr.rel target = $region99
                $region104: #{net_forward.3} parent=96 // loop_exit
                  _
              $region97: #{net_forward.3} parent=81 // pred_fallthru
                _
              // Predicated region
              $region105: #{net_forward.3} parent=81 // pred_check
                _
              $region106: #{net_forward.3} parent=81 // pred_check_branch
                %433 = sbr.rel target = $region108
              $region107: #{net_forward.3} parent=81 // pred_region
                _
              $region108: #{net_forward.3} parent=81 // pred_fallthru
                _
            $region82: #{net_forward.3} parent=77 // pred_fallthru
              _
            // Predicated region
            $region83: #{net_forward.3} parent=77 // pred_check
              _
            $region84: #{net_forward.3} parent=77 // pred_check_branch
              %403 = sbr.rel target = $region86
            $region85: #{net_forward.3} parent=77 // pred_region
              %s405 = ssub.s32 256, 1
              loop: start=0, step=1, limit=1
              $region87: #{net_forward.3} parent=85 // loop_pre_header
                _
              $region88: #{net_forward.3} parent=85 // loop_header
                %s407 = sphi 0, %s411
                %p408 = scmp.ge.s32.totalorder %s407, 1
                %s412 = sphi %s391, %s391
                %s413 = sphi %s397, %s397
              $region89: #{net_forward.3} parent=85 // loop_header_branch
                %410 = sbr.rel (%p408) target = $region93
              $region90: #{net_forward.3} parent=85 // loop_body
                %v414 = vld [vmem:[%s412] sm:%s405]
                %415 = vst [vmem:[%s413] sm:%s405] %v414
                %v416 = vld [vmem:[%s412 + $0x8] sm:%s405]
                %417 = vst [vmem:[%s413 + $0x10] sm:%s405] %v416
              $region91: #{net_forward.3} parent=85 // loop_footer
                %s411 = sadd.s32 1, %s407
              $region92: #{net_forward.3} parent=85 // loop_footer_branch
                %406 = sbr.rel target = $region88
              $region93: #{net_forward.3} parent=85 // loop_exit
                _
            $region86: #{net_forward.3} parent=77 // pred_fallthru
              _
          $region78: #{net_forward.3} parent=73 // pred_fallthru
            _
          %434 = vnop
        $region74: #{net_forward.3} parent=65 // pred_fallthru
          _
      $region66: #{net_forward.3} parent=5 // pred_fallthru
        _
      %p435 = scmp.le.s32.totalorder 2, %s9
      // Predicated region
      $region109: #{net_forward.3} parent=5 // pred_check
        %p436 = pneg %p435
      $region110: #{net_forward.3} parent=5 // pred_check_branch
        %438 = sbr.rel (%p436) target = $region112
      $region111: #{net_forward.3} parent=5 // pred_region
        %s439 = ssub.s32 %s9, 2
        // Predicated region
        $region113: #{net_forward.3} parent=111 // pred_check
          %p440 = pneg %p106
        $region114: #{net_forward.3} parent=111 // pred_check_branch
          %442 = sbr.rel (%p440) target = $region116
        $region115: #{net_forward.3} parent=111 // pred_region
          %s443 = sand.u32 %s91, 1
          %s444 = sand.u32 %s91, 1
          %s445 = smul.addr %s444, 16
          %s446 = scalar_lea.vmem [#allocation3], %s445
        $region116: #{net_forward.3} parent=111 // pred_fallthru
          _
      $region112: #{net_forward.3} parent=5 // pred_fallthru
        _
    $region6: #{net_forward.3} parent=1 // loop_footer
      %s13 = sadd.s32 1, %s9
    $region7: #{net_forward.3} parent=1 // loop_footer_branch
      %8 = sbr.rel target = $region3
    $region8: #{net_forward.3} parent=1 // loop_exit
      _

// kernel: net_forward.4
$region0: #{net_forward.4}
  #allocation0 [shape = 'u32[]', space=smem, size = 0x4, offset = 0x4, fixed_abs, tag = 'smem constant byte address 0x4 - core index']
  #allocation1 [shape = 'u32[72,128]{1,0:T(1,128)}', space=vmem, size = 0x9000, scoped, tag = 'internal scratch']
  %s0 = inlined_call_operand.vmem [shape: bf16[192,128], index: 0, kind: input, shape index: {}]
  %s1 = inlined_call_operand.vmem [shape: bf16[96,192], index: 1, kind: input, shape index: {}]
  %s2 = inlined_call_operand.vmem [shape: f32[24,1], index: 2, kind: input, shape index: {}]
  %s3 = inlined_call_operand.vmem [shape: bf16[24,128], index: 3, kind: output, shape index: {}]
  %s4 = sld [smem:[#allocation0]]
  $region22: #{net_forward.4} parent=0
    _
  %s6 = ssub.s32 1, %s4
  %s7 = scalar_select 0, %s6, %s4
  // Predicated region
  $region2: #{net_forward.4} parent=0 // pred_check
    _
  $region3: #{net_forward.4} parent=0 // pred_check_branch
    %9 = sbr.rel (0) target = $region5
  $region4: #{net_forward.4} parent=0 // pred_region
    _
  $region5: #{net_forward.4} parent=0 // pred_fallthru
    _
  // Predicated region
  $region6: #{net_forward.4} parent=0 // pred_check
    _
  $region7: #{net_forward.4} parent=0 // pred_check_branch
    %11 = sbr.rel (0) target = $region9
  $region8: #{net_forward.4} parent=0 // pred_region
    _
  $region9: #{net_forward.4} parent=0 // pred_fallthru
    _
  // Predicated region
  $region10: #{net_forward.4} parent=0 // pred_check
    _
  $region11: #{net_forward.4} parent=0 // pred_check_branch
    %13 = sbr.rel (0) target = $region13
  $region12: #{net_forward.4} parent=0 // pred_region
    _
  $region13: #{net_forward.4} parent=0 // pred_fallthru
    _
  %v15 = vld [vmem:[%s1] sm:$0xff]
  %v16 = vld [vmem:[%s1 + $0x8] sm:$0xff]
  %v17 = vld [vmem:[%s1 + $0x10] sm:$0xff]
  %v18 = vld [vmem:[%s1 + $0x18] sm:$0xff]
  %v19 = vld [vmem:[%s1 + $0x20] sm:$0xff]
  %v20 = vld [vmem:[%s1 + $0x28] sm:$0xff]
  %v21 = vld [vmem:[%s1 + $0x30] sm:$0xff]
  %v22 = vld [vmem:[%s1 + $0x38] sm:$0xff]
  %v23 = vld [vmem:[%s1 + $0x40] sm:$0xff]
  %v24 = vld [vmem:[%s1 + $0x48] sm:$0xff]
  %v25 = vld [vmem:[%s1 + $0x50] sm:$0xff]
  %v26 = vld [vmem:[%s1 + $0x58] sm:$0xff]
  %v27 = vld [vmem:[%s0] sm:$0xf]
  %v28 = vld [vmem:[%s0 + $0x4] sm:$0xf]
  %v29 = vld [vmem:[%s0 + $0x8] sm:$0xf]
  %v30 = vld [vmem:[%s0 + $0xc] sm:$0xf]
  %v31 = vld [vmem:[%s0 + $0x10] sm:$0xf]
  %v32 = vld [vmem:[%s0 + $0x14] sm:$0xf]
  %v33 = vld [vmem:[%s0 + $0x18] sm:$0xf]
  %v34 = vld [vmem:[%s0 + $0x1c] sm:$0xf]
  %v35 = vld [vmem:[%s0 + $0x20] sm:$0xf]
  %v36 = vld [vmem:[%s0 + $0x24] sm:$0xf]
  %v37 = vld [vmem:[%s0 + $0x28] sm:$0xf]
  %v38 = vld [vmem:[%s0 + $0x2c] sm:$0xf]
  %v39 = vld [vmem:[%s0 + $0x30] sm:$0xf]
  %v40 = vld [vmem:[%s0 + $0x34] sm:$0xf]
  %v41 = vld [vmem:[%s0 + $0x38] sm:$0xf]
  %v42 = vld [vmem:[%s0 + $0x3c] sm:$0xf]
  %v43 = vld [vmem:[%s0 + $0x40] sm:$0xf]
  %v44 = vld [vmem:[%s0 + $0x44] sm:$0xf]
  %v45 = vld [vmem:[%s0 + $0x48] sm:$0xf]
  %v46 = vld [vmem:[%s0 + $0x4c] sm:$0xf]
  %v47 = vld [vmem:[%s0 + $0x50] sm:$0xf]
  %v48 = vld [vmem:[%s0 + $0x54] sm:$0xf]
  %v49 = vld [vmem:[%s0 + $0x58] sm:$0xf]
  %v50 = vld [vmem:[%s0 + $0x5c] sm:$0xf]
  %v63 = vunpack.c.l.b16 %v15
  %v64 = vunpack.c.h.b16 %v15
  %v65 = vunpack.c.l.b16 %v16
  %v66 = vunpack.c.h.b16 %v16
  %v67 = vunpack.c.l.b16 %v17
  %v68 = vunpack.c.h.b16 %v17
  %v69 = vunpack.c.l.b16 %v18
  %v70 = vunpack.c.h.b16 %v18
  %v71 = vunpack.c.l.b16 %v19
  %v72 = vunpack.c.h.b16 %v19
  %v73 = vunpack.c.l.b16 %v20
  %v74 = vunpack.c.h.b16 %v20
  %v75 = vunpack.c.l.b16 %v21
  %v76 = vunpack.c.h.b16 %v21
  %v77 = vunpack.c.l.b16 %v22
  %v78 = vunpack.c.h.b16 %v22
  %v79 = vunpack.c.l.b16 %v23
  %v80 = vunpack.c.h.b16 %v23
  %v81 = vunpack.c.l.b16 %v24
  %v82 = vunpack.c.h.b16 %v24
  %v83 = vunpack.c.l.b16 %v25
  %v84 = vunpack.c.h.b16 %v25
  %v85 = vunpack.c.l.b16 %v26
  %v86 = vunpack.c.h.b16 %v26
  %v87 = vpack.c.b16 %v65, %v63
  %v88 = vpack.c.b16 %v66, %v64
  %v89 = vpack.c.b16 %v69, %v67
  %v90 = vpack.c.b16 %v70, %v68
  %v91 = vpack.c.b16 %v73, %v71
  %v92 = vpack.c.b16 %v74, %v72
  %v93 = vpack.c.b16 %v77, %v75
  %v94 = vpack.c.b16 %v78, %v76
  %v95 = vpack.c.b16 %v81, %v79
  %v96 = vpack.c.b16 %v82, %v80
  %v97 = vpack.c.b16 %v85, %v83
  %v98 = vpack.c.b16 %v86, %v84
  %v129 = vunpack.c.l.b16 %v27
  %v130 = vunpack.c.l.b16 %v28
  %v131 = vunpack.c.l.b16 %v29
  %v132 = vunpack.c.l.b16 %v30
  %v133 = vunpack.c.l.b16 %v31
  %v134 = vunpack.c.l.b16 %v32
  %v135 = vunpack.c.l.b16 %v33
  %v136 = vunpack.c.l.b16 %v34
  %v137 = vunpack.c.l.b16 %v35
  %v138 = vunpack.c.l.b16 %v36
  %v139 = vunpack.c.l.b16 %v37
  %v140 = vunpack.c.l.b16 %v38
  %v141 = vunpack.c.l.b16 %v39
  %v142 = vunpack.c.l.b16 %v40
  %v143 = vunpack.c.l.b16 %v41
  %v144 = vunpack.c.l.b16 %v42
  %v145 = vunpack.c.l.b16 %v43
  %v146 = vunpack.c.l.b16 %v44
  %v147 = vunpack.c.l.b16 %v45
  %v148 = vunpack.c.l.b16 %v46
  %v149 = vunpack.c.l.b16 %v47
  %v150 = vunpack.c.l.b16 %v48
  %v151 = vunpack.c.l.b16 %v49
  %v152 = vunpack.c.l.b16 %v50
  %v153 = vpack.c.b16 %v130, %v129
  %v154 = vpack.c.b16 %v132, %v131
  %v155 = vpack.c.b16 %v134, %v133
  %v156 = vpack.c.b16 %v136, %v135
  %v157 = vpack.c.b16 %v138, %v137
  %v158 = vpack.c.b16 %v140, %v139
  %v159 = vpack.c.b16 %v142, %v141
  %v160 = vpack.c.b16 %v144, %v143
  %v161 = vpack.c.b16 %v146, %v145
  %v162 = vpack.c.b16 %v148, %v147
  %v163 = vpack.c.b16 %v150, %v149
  %v164 = vpack.c.b16 %v152, %v151
  %vm177 = vcmask 523264
  %v179 = vsel %vm177, %v88, 0
  %v182 = vsel %vm177, %v90, 0
  %v185 = vsel %vm177, %v92, 0
  %v188 = vsel %vm177, %v94, 0
  %v191 = vsel %vm177, %v96, 0
  %v194 = vsel %vm177, %v98, 0
  %196 = vmatpush.bf16.msra.mxu0 %v160
  %197 = vmatpush.bf16.msra.mxu0 %v159
  %198 = vmatpush.bf16.msra.mxu0 %v158
  %199 = vmatpush.bf16.msra.mxu0 %v157
  %200 = vmatpush.bf16.msra.mxu0 %v156
  %201 = vmatpush.bf16.msra.mxu0 %v155
  %202 = vmatpush.bf16.msra.mxu0 %v154
  %203 = vmatpush.bf16.msra.mxu0 %v153
  %204 = vmatmul.bf16.gmra.mxu0 %v87
  %v205 = vpop.f32.mrf.mxu0
  %v206 = vadd.f32 0.0, %v205
  %v207 = vpop.f32.mrf.mxu0
  %v208 = vadd.f32 0.0, %v207
  %209 = vmatmul.bf16.gmra.mxu0 %v89
  %v210 = vpop.f32.mrf.mxu0
  %v211 = vadd.f32 0.0, %v210
  %v212 = vpop.f32.mrf.mxu0
  %v213 = vadd.f32 0.0, %v212
  %214 = vmatmul.bf16.gmra.mxu0 %v91
  %v215 = vpop.f32.mrf.mxu0
  %v216 = vadd.f32 0.0, %v215
  %v217 = vpop.f32.mrf.mxu0
  %v218 = vadd.f32 0.0, %v217
  %219 = vmatmul.bf16.gmra.mxu0 %v93
  %v220 = vpop.f32.mrf.mxu0
  %v221 = vadd.f32 0.0, %v220
  %v222 = vpop.f32.mrf.mxu0
  %v223 = vadd.f32 0.0, %v222
  %224 = vmatmul.bf16.gmra.mxu0 %v95
  %v225 = vpop.f32.mrf.mxu0
  %v226 = vadd.f32 0.0, %v225
  %v227 = vpop.f32.mrf.mxu0
  %v228 = vadd.f32 0.0, %v227
  %229 = vmatmul.bf16.gmra.mxu0 %v97
  %v230 = vpop.f32.mrf.mxu0
  %v231 = vadd.f32 0.0, %v230
  %v232 = vpop.f32.mrf.mxu0
  %v233 = vadd.f32 0.0, %v232
  %234 = vdwg.mxu0
  %235 = vmatpush.bf16.msra.mxu0 0
  %236 = vmatpush.bf16.msra.mxu0 0
  %237 = vmatpush.bf16.msra.mxu0 0
  %238 = vmatpush.bf16.msra.mxu0 0
  %239 = vmatpush.bf16.msra.mxu0 %v164
  %240 = vmatpush.bf16.msra.mxu0 %v163
  %241 = vmatpush.bf16.msra.mxu0 %v162
  %242 = vmatpush.bf16.msra.mxu0 %v161
  %243 = vmatmul.bf16.gmra.mxu0 %v179
  %v244 = vpop.f32.mrf.mxu0
  %v245 = vadd.f32 %v206, %v244
  %v246 = vpop.f32.mrf.mxu0
  %v247 = vadd.f32 %v208, %v246
  %248 = vmatmul.bf16.gmra.mxu0 %v182
  %v249 = vpop.f32.mrf.mxu0
  %v250 = vadd.f32 %v211, %v249
  %v251 = vpop.f32.mrf.mxu0
  %v252 = vadd.f32 %v213, %v251
  %253 = vmatmul.bf16.gmra.mxu0 %v185
  %v254 = vpop.f32.mrf.mxu0
  %v255 = vadd.f32 %v216, %v254
  %v256 = vpop.f32.mrf.mxu0
  %v257 = vadd.f32 %v218, %v256
  %258 = vmatmul.bf16.gmra.mxu0 %v188
  %v259 = vpop.f32.mrf.mxu0
  %v260 = vadd.f32 %v221, %v259
  %v261 = vpop.f32.mrf.mxu0
  %v262 = vadd.f32 %v223, %v261
  %263 = vmatmul.bf16.gmra.mxu0 %v191
  %v264 = vpop.f32.mrf.mxu0
  %v265 = vadd.f32 %v226, %v264
  %v266 = vpop.f32.mrf.mxu0
  %v267 = vadd.f32 %v228, %v266
  %268 = vmatmul.bf16.gmra.mxu0 %v194
  %v269 = vpop.f32.mrf.mxu0
  %v270 = vadd.f32 %v231, %v269
  %v271 = vpop.f32.mrf.mxu0
  %v272 = vadd.f32 %v233, %v271
  %273 = vdwg.mxu0
  %v274 = vmax.f32 %v245, %v252
  %v275 = vmax.f32 %v247, %v255
  %v276 = vmax.f32 %v250, %v257
  %v277 = vmax.f32 %v274, %v260
  %v278 = vmax.f32 %v275, %v262
  %v279 = vmax.f32 %v276, %v265
  %v280 = vmax.f32 %v277, %v267
  %v281 = vmax.f32 %v278, %v270
  %v282 = vmax.f32 %v279, %v272
  %v283 = vld [vmem:[%s2] sm:$0xff]
  %v284 = vld [vmem:[%s2 + $0x8] sm:$0xff]
  %v285 = vld [vmem:[%s2 + $0x10] sm:$0xff]
  %287 = vset.pattern.permute.xlu0 0
  %288 = vperm.xlu0 %287, %v283
  %v289 = vpop.permute.xlu0 %288
  %292 = vset.pattern.permute.xlu0 0
  %293 = vperm.xlu0 %292, %v284
  %v294 = vpop.permute.xlu0 %293
  %297 = vset.pattern.permute.xlu0 0
  %298 = vperm.xlu0 %297, %v285
  %v299 = vpop.permute.xlu0 %298
  %v301 = vadd.f32 %v280, %v289
  %v302 = vadd.f32 %v281, %v294
  %v303 = vadd.f32 %v282, %v299
  %v304 = vpack.c.bf16 %v301, %v301
  %v305 = vpack.c.bf16 %v302, %v302
  %v306 = vpack.c.bf16 %v303, %v303
  %307 = vst [vmem:[%s3] sm:$0xf] %v304
  %308 = vst [vmem:[%s3 + $0x4] sm:$0xf] %v305
  %309 = vst [vmem:[%s3 + $0x8] sm:$0xf] %v306
  // Predicated region
  $region14: #{net_forward.4} parent=0 // pred_check
    _
  $region15: #{net_forward.4} parent=0 // pred_check_branch
    %311 = sbr.rel (0) target = $region17
  $region16: #{net_forward.4} parent=0 // pred_region
    _
  $region17: #{net_forward.4} parent=0 // pred_fallthru
    _
  // Predicated region
  $region18: #{net_forward.4} parent=0 // pred_check
    _
  $region19: #{net_forward.4} parent=0 // pred_check_branch
    %313 = sbr.rel (0) target = $region21
  $region20: #{net_forward.4} parent=0 // pred_region
    _
  $region21: #{net_forward.4} parent=0 // pred_fallthru
    _

// kernel: net_forward.5
$region0: #{net_forward.5}
  #allocation0 [shape = 'u32[]', space=smem, size = 0x4, offset = 0x4, fixed_abs, tag = 'smem constant byte address 0x4 - core index']
  #allocation1 [shape = 'u32[72,128]{1,0:T(1,128)}', space=vmem, size = 0x9000, scoped, tag = 'internal scratch']
  %s0 = inlined_call_operand.vmem [shape: bf16[864,128], index: 0, kind: input, shape index: {}]
  %s1 = inlined_call_operand.vmem [shape: bf16[10,864], index: 1, kind: input, shape index: {}]
  %s2 = inlined_call_operand.vmem [shape: f32[10,1], index: 2, kind: input, shape index: {}]
  %s3 = inlined_call_operand.vmem [shape: f32[10,128], index: 3, kind: output, shape index: {}]
  %s4 = sld [smem:[#allocation0]]
  $region22: #{net_forward.5} parent=0
    _
  %s6 = ssub.s32 1, %s4
  %s7 = scalar_select 0, %s6, %s4
  // Predicated region
  $region2: #{net_forward.5} parent=0 // pred_check
    _
  $region3: #{net_forward.5} parent=0 // pred_check_branch
    %9 = sbr.rel (0) target = $region5
  $region4: #{net_forward.5} parent=0 // pred_region
    _
  $region5: #{net_forward.5} parent=0 // pred_fallthru
    _
  // Predicated region
  $region6: #{net_forward.5} parent=0 // pred_check
    _
  $region7: #{net_forward.5} parent=0 // pred_check_branch
    %11 = sbr.rel (0) target = $region9
  $region8: #{net_forward.5} parent=0 // pred_region
    _
  $region9: #{net_forward.5} parent=0 // pred_fallthru
    _
  // Predicated region
  $region10: #{net_forward.5} parent=0 // pred_check
    _
  $region11: #{net_forward.5} parent=0 // pred_check_branch
    %13 = sbr.rel (0) target = $region13
  $region12: #{net_forward.5} parent=0 // pred_region
    _
  $region13: #{net_forward.5} parent=0 // pred_fallthru
    _
  %v15 = vld [vmem:[%s1] sm:$0xff]
  %v16 = vld [vmem:[%s1 + $0x8] sm:$0xff]
  %v17 = vld [vmem:[%s1 + $0x10] sm:$0xff]
  %v18 = vld [vmem:[%s1 + $0x18] sm:$0xf]
  %v19 = vld [vmem:[%s1 + $0x1c] sm:$0x11]
  %v20 = vld [vmem:[%s1 + $0x24] sm:$0x11]
  %v21 = vld [vmem:[%s1 + $0x2c] sm:$0x11]
  %v22 = vld [vmem:[%s1 + $0x34] sm:$0x1]
  %v23 = vld [vmem:[%s0] sm:$0xf]
  %v24 = vld [vmem:[%s0 + $0x4] sm:$0xf]
  %v25 = vld [vmem:[%s0 + $0x8] sm:$0xf]
  %v26 = vld [vmem:[%s0 + $0xc] sm:$0xf]
  %v27 = vld [vmem:[%s0 + $0x10] sm:$0xf]
  %v28 = vld [vmem:[%s0 + $0x14] sm:$0xf]
  %v29 = vld [vmem:[%s0 + $0x18] sm:$0xf]
  %v30 = vld [vmem:[%s0 + $0x1c] sm:$0xf]
  %v31 = vld [vmem:[%s0 + $0x20] sm:$0xf]
  %v32 = vld [vmem:[%s0 + $0x24] sm:$0xf]
  %v33 = vld [vmem:[%s0 + $0x28] sm:$0xf]
  %v34 = vld [vmem:[%s0 + $0x2c] sm:$0xf]
  %v35 = vld [vmem:[%s0 + $0x30] sm:$0xf]
  %v36 = vld [vmem:[%s0 + $0x34] sm:$0xf]
  %v37 = vld [vmem:[%s0 + $0x38] sm:$0xf]
  %v38 = vld [vmem:[%s0 + $0x3c] sm:$0xf]
  %v39 = vld [vmem:[%s0 + $0x40] sm:$0xf]
  %v40 = vld [vmem:[%s0 + $0x44] sm:$0xf]
  %v41 = vld [vmem:[%s0 + $0x48] sm:$0xf]
  %v42 = vld [vmem:[%s0 + $0x4c] sm:$0xf]
  %v43 = vld [vmem:[%s0 + $0x50] sm:$0xf]
  %v44 = vld [vmem:[%s0 + $0x54] sm:$0xf]
  %v45 = vld [vmem:[%s0 + $0x58] sm:$0xf]
  %v46 = vld [vmem:[%s0 + $0x5c] sm:$0xf]
  %v47 = vld [vmem:[%s0 + $0x60] sm:$0xf]
  %v48 = vld [vmem:[%s0 + $0x64] sm:$0xf]
  %v49 = vld [vmem:[%s0 + $0x68] sm:$0xf]
  %v50 = vld [vmem:[%s0 + $0x6c] sm:$0xf]
  %v51 = vld [vmem:[%s0 + $0x70] sm:$0xf]
  %v52 = vld [vmem:[%s0 + $0x74] sm:$0xf]
  %v53 = vld [vmem:[%s0 + $0x78] sm:$0xf]
  %v54 = vld [vmem:[%s0 + $0x7c] sm:$0xf]
  %v55 = vld [vmem:[%s0 + $0x80] sm:$0xf]
  %v56 = vld [vmem:[%s0 + $0x84] sm:$0xf]
  %v57 = vld [vmem:[%s0 + $0x88] sm:$0xf]
  %v58 = vld [vmem:[%s0 + $0x8c] sm:$0xf]
  %v59 = vld [vmem:[%s0 + $0x90] sm:$0xf]
  %v60 = vld [vmem:[%s0 + $0x94] sm:$0xf]
  %v61 = vld [vmem:[%s0 + $0x98] sm:$0xf]
  %v62 = vld [vmem:[%s0 + $0x9c] sm:$0xf]
  %v63 = vld [vmem:[%s0 + $0xa0] sm:$0xf]
  %v64 = vld [vmem:[%s0 + $0xa4] sm:$0xf]
  %v65 = vld [vmem:[%s0 + $0xa8] sm:$0xf]
  %v66 = vld [vmem:[%s0 + $0xac] sm:$0xf]
  %v67 = vld [vmem:[%s0 + $0xb0] sm:$0xf]
  %v68 = vld [vmem:[%s0 + $0xb4] sm:$0xf]
  %v69 = vld [vmem:[%s0 + $0xb8] sm:$0xf]
  %v70 = vld [vmem:[%s0 + $0xbc] sm:$0xf]
  %v71 = vld [vmem:[%s0 + $0xc0] sm:$0xf]
  %v72 = vld [vmem:[%s0 + $0xc4] sm:$0xf]
  %v73 = vld [vmem:[%s0 + $0xc8] sm:$0xf]
  %v74 = vld [vmem:[%s0 + $0xcc] sm:$0xf]
  %v75 = vld [vmem:[%s0 + $0xd0] sm:$0xf]
  %v76 = vld [vmem:[%s0 + $0xd4] sm:$0xf]
  %v77 = vld [vmem:[%s0 + $0xd8] sm:$0xf]
  %v78 = vld [vmem:[%s0 + $0xdc] sm:$0xf]
  %v79 = vld [vmem:[%s0 + $0xe0] sm:$0xf]
  %v80 = vld [vmem:[%s0 + $0xe4] sm:$0xf]
  %v81 = vld [vmem:[%s0 + $0xe8] sm:$0xf]
  %v82 = vld [vmem:[%s0 + $0xec] sm:$0xf]
  %v83 = vld [vmem:[%s0 + $0xf0] sm:$0xf]
  %v84 = vld [vmem:[%s0 + $0xf4] sm:$0xf]
  %v85 = vld [vmem:[%s0 + $0xf8] sm:$0xf]
  %v86 = vld [vmem:[%s0 + $0xfc] sm:$0xf]
  %v87 = vld [vmem:[%s0 + $0x100] sm:$0xf]
  %v88 = vld [vmem:[%s0 + $0x104] sm:$0xf]
  %v89 = vld [vmem:[%s0 + $0x108] sm:$0xf]
  %v90 = vld [vmem:[%s0 + $0x10c] sm:$0xf]
  %v91 = vld [vmem:[%s0 + $0x110] sm:$0xf]
  %v92 = vld [vmem:[%s0 + $0x114] sm:$0xf]
  %v93 = vld [vmem:[%s0 + $0x118] sm:$0xf]
  %v94 = vld [vmem:[%s0 + $0x11c] sm:$0xf]
  %v95 = vld [vmem:[%s0 + $0x120] sm:$0xf]
  %v96 = vld [vmem:[%s0 + $0x124] sm:$0xf]
  %v97 = vld [vmem:[%s0 + $0x128] sm:$0xf]
  %v98 = vld [vmem:[%s0 + $0x12c] sm:$0xf]
  %v99 = vld [vmem:[%s0 + $0x130] sm:$0xf]
  %v100 = vld [vmem:[%s0 + $0x134] sm:$0xf]
  %v101 = vld [vmem:[%s0 + $0x138] sm:$0xf]
  %v102 = vld [vmem:[%s0 + $0x13c] sm:$0xf]
  %v103 = vld [vmem:[%s0 + $0x140] sm:$0xf]
  %v104 = vld [vmem:[%s0 + $0x144] sm:$0xf]
  %v105 = vld [vmem:[%s0 + $0x148] sm:$0xf]
  %v106 = vld [vmem:[%s0 + $0x14c] sm:$0xf]
  %v107 = vld [vmem:[%s0 + $0x150] sm:$0xf]
  %v108 = vld [vmem:[%s0 + $0x154] sm:$0xf]
  %v109 = vld [vmem:[%s0 + $0x158] sm:$0xf]
  %v110 = vld [vmem:[%s0 + $0x15c] sm:$0xf]
  %v111 = vld [vmem:[%s0 + $0x160] sm:$0xf]
  %v112 = vld [vmem:[%s0 + $0x164] sm:$0xf]
  %v113 = vld [vmem:[%s0 + $0x168] sm:$0xf]
  %v114 = vld [vmem:[%s0 + $0x16c] sm:$0xf]
  %v115 = vld [vmem:[%s0 + $0x170] sm:$0xf]
  %v116 = vld [vmem:[%s0 + $0x174] sm:$0xf]
  %v117 = vld [vmem:[%s0 + $0x178] sm:$0xf]
  %v118 = vld [vmem:[%s0 + $0x17c] sm:$0xf]
  %v119 = vld [vmem:[%s0 + $0x180] sm:$0xf]
  %v120 = vld [vmem:[%s0 + $0x184] sm:$0xf]
  %v121 = vld [vmem:[%s0 + $0x188] sm:$0xf]
  %v122 = vld [vmem:[%s0 + $0x18c] sm:$0xf]
  %v123 = vld [vmem:[%s0 + $0x190] sm:$0xf]
  %v124 = vld [vmem:[%s0 + $0x194] sm:$0xf]
  %v125 = vld [vmem:[%s0 + $0x198] sm:$0xf]
  %v126 = vld [vmem:[%s0 + $0x19c] sm:$0xf]
  %v127 = vld [vmem:[%s0 + $0x1a0] sm:$0xf]
  %v128 = vld [vmem:[%s0 + $0x1a4] sm:$0xf]
  %v129 = vld [vmem:[%s0 + $0x1a8] sm:$0xf]
  %v130 = vld [vmem:[%s0 + $0x1ac] sm:$0xf]
  %v131 = vld [vmem:[%s2] sm:$0xff]
  %v132 = vld [vmem:[%s2 + $0x8] sm:$0x3]
  %134 = vset.pattern.permute.xlu0 0
  %135 = vperm.xlu0 %134, %v131
  %v136 = vpop.permute.xlu0 %135
  %139 = vset.pattern.permute.xlu0 0
  %140 = vperm.xlu0 %139, %v132
  %v141 = vpop.permute.xlu0 %140
  %v151 = vunpack.c.l.b16 %v15
  %v152 = vunpack.c.h.b16 %v15
  %v153 = vunpack.c.l.b16 %v16
  %v154 = vunpack.c.h.b16 %v16
  %v155 = vunpack.c.l.b16 %v17
  %v156 = vunpack.c.h.b16 %v17
  %v157 = vunpack.c.l.b16 %v18
  %v158 = vunpack.c.l.b16 %v19
  %v159 = vunpack.c.h.b16 %v19
  %v160 = vunpack.c.l.b16 %v20
  %v161 = vunpack.c.h.b16 %v20
  %v162 = vunpack.c.l.b16 %v21
  %v163 = vunpack.c.h.b16 %v21
  %v164 = vunpack.c.l.b16 %v22
  %v165 = vpack.c.b16 %v158, %v151
  %v166 = vpack.c.b16 %v159, %v152
  %v167 = vpack.c.b16 %v160, %v153
  %v168 = vpack.c.b16 %v161, %v154
  %v169 = vpack.c.b16 %v162, %v155
  %v170 = vpack.c.b16 %v163, %v156
  %v171 = vpack.c.b16 %v164, %v157
  %v286 = vunpack.c.l.b16 %v23
  %v287 = vunpack.c.l.b16 %v24
  %v288 = vunpack.c.l.b16 %v25
  %v289 = vunpack.c.l.b16 %v26
  %v290 = vunpack.c.l.b16 %v27
  %v291 = vunpack.c.l.b16 %v28
  %v292 = vunpack.c.l.b16 %v29
  %v293 = vunpack.c.l.b16 %v30
  %v294 = vunpack.c.l.b16 %v31
  %v295 = vunpack.c.l.b16 %v32
  %v296 = vunpack.c.l.b16 %v33
  %v297 = vunpack.c.l.b16 %v34
  %v298 = vunpack.c.l.b16 %v35
  %v299 = vunpack.c.l.b16 %v36
  %v300 = vunpack.c.l.b16 %v37
  %v301 = vunpack.c.l.b16 %v38
  %v302 = vunpack.c.l.b16 %v39
  %v303 = vunpack.c.l.b16 %v40
  %v304 = vunpack.c.l.b16 %v41
  %v305 = vunpack.c.l.b16 %v42
  %v306 = vunpack.c.l.b16 %v43
  %v307 = vunpack.c.l.b16 %v44
  %v308 = vunpack.c.l.b16 %v45
  %v309 = vunpack.c.l.b16 %v46
  %v310 = vunpack.c.l.b16 %v47
  %v311 = vunpack.c.l.b16 %v48
  %v312 = vunpack.c.l.b16 %v49
  %v313 = vunpack.c.l.b16 %v50
  %v314 = vunpack.c.l.b16 %v51
  %v315 = vunpack.c.l.b16 %v52
  %v316 = vunpack.c.l.b16 %v53
  %v317 = vunpack.c.l.b16 %v54
  %v318 = vunpack.c.l.b16 %v55
  %v319 = vunpack.c.l.b16 %v56
  %v320 = vunpack.c.l.b16 %v57
  %v321 = vunpack.c.l.b16 %v58
  %v322 = vunpack.c.l.b16 %v59
  %v323 = vunpack.c.l.b16 %v60
  %v324 = vunpack.c.l.b16 %v61
  %v325 = vunpack.c.l.b16 %v62
  %v326 = vunpack.c.l.b16 %v63
  %v327 = vunpack.c.l.b16 %v64
  %v328 = vunpack.c.l.b16 %v65
  %v329 = vunpack.c.l.b16 %v66
  %v330 = vunpack.c.l.b16 %v67
  %v331 = vunpack.c.l.b16 %v68
  %v332 = vunpack.c.l.b16 %v69
  %v333 = vunpack.c.l.b16 %v70
  %v334 = vunpack.c.l.b16 %v71
  %v335 = vunpack.c.l.b16 %v72
  %v336 = vunpack.c.l.b16 %v73
  %v337 = vunpack.c.l.b16 %v74
  %v338 = vunpack.c.l.b16 %v75
  %v339 = vunpack.c.l.b16 %v76
  %v340 = vunpack.c.l.b16 %v77
  %v341 = vunpack.c.l.b16 %v78
  %v342 = vunpack.c.l.b16 %v79
  %v343 = vunpack.c.l.b16 %v80
  %v344 = vunpack.c.l.b16 %v81
  %v345 = vunpack.c.l.b16 %v82
  %v346 = vunpack.c.l.b16 %v83
  %v347 = vunpack.c.l.b16 %v84
  %v348 = vunpack.c.l.b16 %v85
  %v349 = vunpack.c.l.b16 %v86
  %v350 = vunpack.c.l.b16 %v87
  %v351 = vunpack.c.l.b16 %v88
  %v352 = vunpack.c.l.b16 %v89
  %v353 = vunpack.c.l.b16 %v90
  %v354 = vunpack.c.l.b16 %v91
  %v355 = vunpack.c.l.b16 %v92
  %v356 = vunpack.c.l.b16 %v93
  %v357 = vunpack.c.l.b16 %v94
  %v358 = vunpack.c.l.b16 %v95
  %v359 = vunpack.c.l.b16 %v96
  %v360 = vunpack.c.l.b16 %v97
  %v361 = vunpack.c.l.b16 %v98
  %v362 = vunpack.c.l.b16 %v99
  %v363 = vunpack.c.l.b16 %v100
  %v364 = vunpack.c.l.b16 %v101
  %v365 = vunpack.c.l.b16 %v102
  %v366 = vunpack.c.l.b16 %v103
  %v367 = vunpack.c.l.b16 %v104
  %v368 = vunpack.c.l.b16 %v105
  %v369 = vunpack.c.l.b16 %v106
  %v370 = vunpack.c.l.b16 %v107
  %v371 = vunpack.c.l.b16 %v108
  %v372 = vunpack.c.l.b16 %v109
  %v373 = vunpack.c.l.b16 %v110
  %v374 = vunpack.c.l.b16 %v111
  %v375 = vunpack.c.l.b16 %v112
  %v376 = vunpack.c.l.b16 %v113
  %v377 = vunpack.c.l.b16 %v114
  %v378 = vunpack.c.l.b16 %v115
  %v379 = vunpack.c.l.b16 %v116
  %v380 = vunpack.c.l.b16 %v117
  %v381 = vunpack.c.l.b16 %v118
  %v382 = vunpack.c.l.b16 %v119
  %v383 = vunpack.c.l.b16 %v120
  %v384 = vunpack.c.l.b16 %v121
  %v385 = vunpack.c.l.b16 %v122
  %v386 = vunpack.c.l.b16 %v123
  %v387 = vunpack.c.l.b16 %v124
  %v388 = vunpack.c.l.b16 %v125
  %v389 = vunpack.c.l.b16 %v126
  %v390 = vunpack.c.l.b16 %v127
  %v391 = vunpack.c.l.b16 %v128
  %v392 = vunpack.c.l.b16 %v129
  %v393 = vunpack.c.l.b16 %v130
  %v394 = vpack.c.b16 %v287, %v286
  %v395 = vpack.c.b16 %v289, %v288
  %v396 = vpack.c.b16 %v291, %v290
  %v397 = vpack.c.b16 %v293, %v292
  %v398 = vpack.c.b16 %v295, %v294
  %v399 = vpack.c.b16 %v297, %v296
  %v400 = vpack.c.b16 %v299, %v298
  %v401 = vpack.c.b16 %v301, %v300
  %v402 = vpack.c.b16 %v303, %v302
  %v403 = vpack.c.b16 %v305, %v304
  %v404 = vpack.c.b16 %v307, %v306
  %v405 = vpack.c.b16 %v309, %v308
  %v406 = vpack.c.b16 %v311, %v310
  %v407 = vpack.c.b16 %v313, %v312
  %v408 = vpack.c.b16 %v315, %v314
  %v409 = vpack.c.b16 %v317, %v316
  %v410 = vpack.c.b16 %v319, %v318
  %v411 = vpack.c.b16 %v321, %v320
  %v412 = vpack.c.b16 %v323, %v322
  %v413 = vpack.c.b16 %v325, %v324
  %v414 = vpack.c.b16 %v327, %v326
  %v415 = vpack.c.b16 %v329, %v328
  %v416 = vpack.c.b16 %v331, %v330
  %v417 = vpack.c.b16 %v333, %v332
  %v418 = vpack.c.b16 %v335, %v334
  %v419 = vpack.c.b16 %v337, %v336
  %v420 = vpack.c.b16 %v339, %v338
  %v421 = vpack.c.b16 %v341, %v340
  %v422 = vpack.c.b16 %v343, %v342
  %v423 = vpack.c.b16 %v345, %v344
  %v424 = vpack.c.b16 %v347, %v346
  %v425 = vpack.c.b16 %v349, %v348
  %v426 = vpack.c.b16 %v351, %v350
  %v427 = vpack.c.b16 %v353, %v352
  %v428 = vpack.c.b16 %v355, %v354
  %v429 = vpack.c.b16 %v357, %v356
  %v430 = vpack.c.b16 %v359, %v358
  %v431 = vpack.c.b16 %v361, %v360
  %v432 = vpack.c.b16 %v363, %v362
  %v433 = vpack.c.b16 %v365, %v364
  %v434 = vpack.c.b16 %v367, %v366
  %v435 = vpack.c.b16 %v369, %v368
  %v436 = vpack.c.b16 %v371, %v370
  %v437 = vpack.c.b16 %v373, %v372
  %v438 = vpack.c.b16 %v375, %v374
  %v439 = vpack.c.b16 %v377, %v376
  %v440 = vpack.c.b16 %v379, %v378
  %v441 = vpack.c.b16 %v381, %v380
  %v442 = vpack.c.b16 %v383, %v382
  %v443 = vpack.c.b16 %v385, %v384
  %v444 = vpack.c.b16 %v387, %v386
  %v445 = vpack.c.b16 %v389, %v388
  %v446 = vpack.c.b16 %v391, %v390
  %v447 = vpack.c.b16 %v393, %v392
  %vm502 = vcmask 785408
  %v504 = vsel %vm502, %v171, 0
  %506 = vmatpush.bf16.msra.mxu0 %v401
  %507 = vmatpush.bf16.msra.mxu0 %v400
  %508 = vmatpush.bf16.msra.mxu0 %v399
  %509 = vmatpush.bf16.msra.mxu0 %v398
  %510 = vmatpush.bf16.msra.mxu0 %v397
  %511 = vmatpush.bf16.msra.mxu0 %v396
  %512 = vmatpush.bf16.msra.mxu0 %v395
  %513 = vmatpush.bf16.msra.mxu0 %v394
  %514 = vmatmul.bf16.gmra.mxu0 %v165
  %v515 = vpop.f32.mrf.mxu0
  %v516 = vadd.f32 %v136, %v515
  %v517 = vpop.f32.mrf.mxu0
  %v518 = vadd.f32 %v141, %v517
  %519 = vdwg.mxu0
  %520 = vmatpush.bf16.msra.mxu0 %v409
  %521 = vmatpush.bf16.msra.mxu0 %v408
  %522 = vmatpush.bf16.msra.mxu0 %v407
  %523 = vmatpush.bf16.msra.mxu0 %v406
  %524 = vmatpush.bf16.msra.mxu0 %v405
  %525 = vmatpush.bf16.msra.mxu0 %v404
  %526 = vmatpush.bf16.msra.mxu0 %v403
  %527 = vmatpush.bf16.msra.mxu0 %v402
  %528 = vmatmul.bf16.gmra.mxu0 %v166
  %v529 = vpop.f32.mrf.mxu0
  %v530 = vadd.f32 %v516, %v529
  %v531 = vpop.f32.mrf.mxu0
  %v532 = vadd.f32 %v518, %v531
  %533 = vdwg.mxu0
  %534 = vmatpush.bf16.msra.mxu0 %v417
  %535 = vmatpush.bf16.msra.mxu0 %v416
  %536 = vmatpush.bf16.msra.mxu0 %v415
  %537 = vmatpush.bf16.msra.mxu0 %v414
  %538 = vmatpush.bf16.msra.mxu0 %v413
  %539 = vmatpush.bf16.msra.mxu0 %v412
  %540 = vmatpush.bf16.msra.mxu0 %v411
  %541 = vmatpush.bf16.msra.mxu0 %v410
  %542 = vmatmul.bf16.gmra.mxu0 %v167
  %v543 = vpop.f32.mrf.mxu0
  %v544 = vadd.f32 %v530, %v543
  %v545 = vpop.f32.mrf.mxu0
  %v546 = vadd.f32 %v532, %v545
  %547 = vdwg.mxu0
  %548 = vmatpush.bf16.msra.mxu0 %v425
  %549 = vmatpush.bf16.msra.mxu0 %v424
  %550 = vmatpush.bf16.msra.mxu0 %v423
  %551 = vmatpush.bf16.msra.mxu0 %v422
  %552 = vmatpush.bf16.msra.mxu0 %v421
  %553 = vmatpush.bf16.msra.mxu0 %v420
  %554 = vmatpush.bf16.msra.mxu0 %v419
  %555 = vmatpush.bf16.msra.mxu0 %v418
  %556 = vmatmul.bf16.gmra.mxu0 %v168
  %v557 = vpop.f32.mrf.mxu0
  %v558 = vadd.f32 %v544, %v557
  %v559 = vpop.f32.mrf.mxu0
  %v560 = vadd.f32 %v546, %v559
  %561 = vdwg.mxu0
  %562 = vmatpush.bf16.msra.mxu0 %v433
  %563 = vmatpush.bf16.msra.mxu0 %v432
  %564 = vmatpush.bf16.msra.mxu0 %v431
  %565 = vmatpush.bf16.msra.mxu0 %v430
  %566 = vmatpush.bf16.msra.mxu0 %v429
  %567 = vmatpush.bf16.msra.mxu0 %v428
  %568 = vmatpush.bf16.msra.mxu0 %v427
  %569 = vmatpush.bf16.msra.mxu0 %v426
  %570 = vmatmul.bf16.gmra.mxu0 %v169
  %v571 = vpop.f32.mrf.mxu0
  %v572 = vadd.f32 %v558, %v571
  %v573 = vpop.f32.mrf.mxu0
  %v574 = vadd.f32 %v560, %v573
  %575 = vdwg.mxu0
  %576 = vmatpush.bf16.msra.mxu0 %v441
  %577 = vmatpush.bf16.msra.mxu0 %v440
  %578 = vmatpush.bf16.msra.mxu0 %v439
  %579 = vmatpush.bf16.msra.mxu0 %v438
  %580 = vmatpush.bf16.msra.mxu0 %v437
  %581 = vmatpush.bf16.msra.mxu0 %v436
  %582 = vmatpush.bf16.msra.mxu0 %v435
  %583 = vmatpush.bf16.msra.mxu0 %v434
  %584 = vmatmul.bf16.gmra.mxu0 %v170
  %v585 = vpop.f32.mrf.mxu0
  %v586 = vadd.f32 %v572, %v585
  %v587 = vpop.f32.mrf.mxu0
  %v588 = vadd.f32 %v574, %v587
  %589 = vdwg.mxu0
  %590 = vmatpush.bf16.msra.mxu0 0
  %591 = vmatpush.bf16.msra.mxu0 0
  %592 = vmatpush.bf16.msra.mxu0 %v447
  %593 = vmatpush.bf16.msra.mxu0 %v446
  %594 = vmatpush.bf16.msra.mxu0 %v445
  %595 = vmatpush.bf16.msra.mxu0 %v444
  %596 = vmatpush.bf16.msra.mxu0 %v443
  %597 = vmatpush.bf16.msra.mxu0 %v442
  %598 = vmatmul.bf16.gmra.mxu0 %v504
  %v599 = vpop.f32.mrf.mxu0
  %v600 = vadd.f32 %v586, %v599
  %v601 = vpop.f32.mrf.mxu0
  %v602 = vadd.f32 %v588, %v601
  %603 = vdwg.mxu0
  %604 = vst [vmem:[%s3] sm:$0xff] %v600
  %605 = vst [vmem:[%s3 + $0x8] sm:$0x3] %v602
  // Predicated region
  $region14: #{net_forward.5} parent=0 // pred_check
    _
  $region15: #{net_forward.5} parent=0 // pred_check_branch
    %607 = sbr.rel (0) target = $region17
  $region16: #{net_forward.5} parent=0 // pred_region
    _
  $region17: #{net_forward.5} parent=0 // pred_fallthru
    _
  // Predicated region
  $region18: #{net_forward.5} parent=0 // pred_check
    _
  $region19: #{net_forward.5} parent=0 // pred_check_branch
    %609 = sbr.rel (0) target = $region21
  $region20: #{net_forward.5} parent=0 // pred_region
    _
  $region21: #{net_forward.5} parent=0 // pred_fallthru
    _

</llo_original>
